<compile_context>
chip_gen: v7x
topology: tpu7x:2x2x1
jax: 0.10.0
libtpu: 0.0.40
codegen_flags: <defaults>
</compile_context>

<pallas_src>
import jax
import jax.numpy as jnp
from jax.experimental import pallas as pl
from jax.experimental.pallas import tpu as pltpu


def _make_distance_kernel(batch, num_neg, state_dim, action_dim, hidden_dim):
    B, N, S, A, H = batch, num_neg, state_dim, action_dim, hidden_dim
    R = (N + 1) * B
    IN = S + A
    BIAS_OFF = IN + 2 * H          # row offsets into the packed weight slab

    def kernel(state_ref, action_ref, noise_ref, w_ref, out_ref, x_ref):
        # ---- assemble the (R, S+A) layer-1 input slab in VMEM (cheap masked stores) --
        # Row layout (sample-major):
        #   rows [0, B)              -> (state, action)        positive pairs
        #   rows [(n+1)B, (n+2)B)    -> (state, noise_n)       n = 0..N-1
        for n in range(N + 1):                              # unrolled at trace time
            x_ref[n * B:(n + 1) * B, 0:S] = state_ref[...]
        x_ref[0:B, S:IN] = action_ref[...]
        x_ref[B:R, S:IN] = noise_ref[...]

        # ---- static slices of the packed weight slab (zero-cost addressing) ----------
        w1 = w_ref[0:IN, :]                                 # (S+A, H)
        w2 = w_ref[IN:IN + H, :]                            # (H, H)
        w3 = w_ref[IN + H:IN + 2 * H, :]                    # (H, H)
        b1 = w_ref[BIAS_OFF + 0:BIAS_OFF + 1, :]            # (1, H)
        b2 = w_ref[BIAS_OFF + 1:BIAS_OFF + 2, :]
        b3 = w_ref[BIAS_OFF + 2:BIAS_OFF + 3, :]
        w4row = w_ref[BIAS_OFF + 3:BIAS_OFF + 4, :]         # (1, H)
        b4 = w_ref[BIAS_OFF + 4:BIAS_OFF + 5, 0:1]          # (1, 1)

        # ---- 4-layer MLP, one pass over all R rows (3 MXU matmuls on the crit path) --
        x = x_ref[...]                                      # (R, S+A)
        h = jnp.maximum(
            jnp.dot(x, w1, preferred_element_type=jnp.float32) + b1, 0.0)
        h = jnp.maximum(
            jnp.dot(h, w2, preferred_element_type=jnp.float32) + b2, 0.0)
        h = jnp.maximum(
            jnp.dot(h, w3, preferred_element_type=jnp.float32) + b3, 0.0)

        # Final Linear(H, 1): VPU multiply + lane reduce.
        e = jnp.sum(h * w4row, axis=-1, keepdims=True) + b4         # (R, 1)

        # exp(-E), no shift: matches the reference numerics exactly and avoids the
        # cross-batch underflow/NaN hazard of a global max-shift.
        en = jnp.exp(-e)                                             # (R, 1)

        pos = en[0:B, :]                                             # (B, 1)

        # Sum the N negative samples with a log2(N)-depth slice-and-add tree.
        s = en[B:R, :]                                               # (N*B, 1)
        if N & (N - 1) == 0:                                         # power-of-two N
            n_blk = N
            while n_blk > 1:
                n_blk //= 2
                s = s[0:n_blk * B, :] + s[n_blk * B:2 * n_blk * B, :]
        else:                                                        # generic fallback
            acc = s[0:B, :]
            for n in range(1, N):
                acc = acc + s[n * B:(n + 1) * B, :]
            s = acc
        neg = s                                                      # (B, 1)

        denom = pos + neg
        inv = pl.reciprocal(denom, approx=True)      # EUP slot
        inv = inv * (2.0 - denom * inv)              # one Newton step -> f32 accuracy
        out_ref[...] = (pos * inv).astype(out_ref.dtype)

    return kernel


def distance_forward(state, action, noise_actions, packed_w):
    """state (B,S), action (B,A), noise_actions (N,B,A), packed_w (85,H); returns (B,1)."""
    B, S = state.shape
    A = action.shape[1]
    N = noise_actions.shape[0]
    H = packed_w.shape[1]

    # Contiguous (N,B,A) -> (N*B,A) is a free (bitcast-style) reshape, no HBM round trip.
    noise_flat = noise_actions.reshape(N * B, A)

    kernel = _make_distance_kernel(B, N, S, A, H)
    # No grid: the whole problem ((N+1)*B = 18 rows, <12 KiB of operands) is one kernel
    # invocation with whole-array refs — any grid split would be pure pipeline overhead.
    return pl.pallas_call(
        kernel,
        out_shape=jax.ShapeDtypeStruct((B, 1), jnp.float32),
        scratch_shapes=[pltpu.VMEM(((N + 1) * B, S + A), jnp.float32)],
    )(state, action, noise_flat, packed_w)


def init_params(key, state_dim, action_dim, hidden_dim):
    """Deterministic init mimicking PyTorch Linear (uniform +/- 1/sqrt(fan_in))."""
    def linear(k, fan_in, fan_out):
        kw, kb = jax.random.split(k)
        bound = 1.0 / jnp.sqrt(fan_in)
        w = jax.random.uniform(kw, (fan_in, fan_out), jnp.float32, -bound, bound)
        b = jax.random.uniform(kb, (1, fan_out), jnp.float32, -bound, bound)
        return w, b

    k1, k2, k3, k4 = jax.random.split(key, 4)
    w1, b1 = linear(k1, state_dim + action_dim, hidden_dim)
    w2, b2 = linear(k2, hidden_dim, hidden_dim)
    w3, b3 = linear(k3, hidden_dim, hidden_dim)
    w4, b4 = linear(k4, hidden_dim, 1)
    return (w1, b1, w2, b2, w3, b3, w4, b4)


def pack_params(params):
    """Pack all weights/biases into one (IN + 2H + 5, H) f32 slab (done once, off-line).

    Rows: [0,IN) W1 | [IN,IN+H) W2 | [IN+H,IN+2H) W3 | then b1, b2, b3, w4-row, b4."""
    w1, b1, w2, b2, w3, b3, w4, b4 = params
    in_dim, H = w1.shape
    off = in_dim + 2 * H
    slab = jnp.zeros((off + 5, H), jnp.float32)
    slab = slab.at[0:in_dim].set(w1)
    slab = slab.at[in_dim:in_dim + H].set(w2)
    slab = slab.at[in_dim + H:in_dim + 2 * H].set(w3)
    slab = slab.at[off + 0].set(b1[0])
    slab = slab.at[off + 1].set(b2[0])
    slab = slab.at[off + 2].set(b3[0])
    slab = slab.at[off + 3].set(w4[:, 0])
    slab = slab.at[off + 4].set(jnp.full((H,), b4[0, 0], jnp.float32))
    return slab


def reference_forward(state, action, noise_actions, params):
    """Plain-JAX reference of Distance.forward for a sanity check."""
    w1, b1, w2, b2, w3, b3, w4, b4 = params

    def mlp(x):
        h = jnp.maximum(x @ w1 + b1, 0.0)
        h = jnp.maximum(h @ w2 + b2, 0.0)
        h = jnp.maximum(h @ w3 + b3, 0.0)
        return h @ w4 + b4

    pos_e = jnp.exp(-mlp(jnp.concatenate([state, action], axis=-1)))            # (B,1)
    neg_e = jnp.exp(-jax.vmap(
        lambda na: mlp(jnp.concatenate([state, na], axis=-1)))(noise_actions))  # (N,B,1)
    neg_e = neg_e.sum(0)
    return pos_e / (pos_e + neg_e)


if __name__ == "__main__":
    # Module hyper-parameters (small, consistent with the PyTorch __init__)
    state_dim = 12
    action_dim = 4
    hidden_dim = 32
    num_negative_samples = 8
    max_action = 1.0
    action_shift = 0.5
    noise_action_range = 2 * max_action * 1.5   # = 3.0

    batch = 2

    key = jax.random.PRNGKey(0)
    k_params, k_state, k_action, k_noise = jax.random.split(key, 4)

    params = init_params(k_params, state_dim, action_dim, hidden_dim)
    packed_w = pack_params(params)              # one-time weight packing

    state = jax.random.normal(k_state, (batch, state_dim), jnp.float32)
    action = jnp.clip(jax.random.normal(k_action, (batch, action_dim), jnp.float32),
                      -max_action, max_action)

    # torch.rand(...) - 0.5, scaled by noise_action_range (deterministic JAX noise).
    noise_actions = (jax.random.uniform(k_noise, (num_negative_samples, batch, action_dim),
                                        jnp.float32) - action_shift) * noise_action_range

    out = distance_forward(state, action, noise_actions, packed_w)
    out = jax.block_until_ready(out)

    ref = reference_forward(state, action, noise_actions, params)
    assert out.shape == (batch, 1)
    assert jnp.allclose(out, ref, atol=1e-5, rtol=1e-5), (out, ref)

    print("KERNEL_OK")
</pallas_src>

<mosaic_0001>
module attributes {stable_mosaic.version = 11 : i64} {
  func.func @kernel(%arg0: memref<2x12xf32, #tpu.memory_space<vmem>>, %arg1: memref<2x4xf32, #tpu.memory_space<vmem>>, %arg2: memref<16x4xf32, #tpu.memory_space<vmem>>, %arg3: memref<85x32xf32, #tpu.memory_space<vmem>>, %arg4: memref<2x1xf32, #tpu.memory_space<vmem>>, %arg5: memref<18x16xf32, #tpu.memory_space<vmem>>) attributes {dimension_semantics = [], scalar_prefetch = 0 : i64, scratch_operands = 1 : i64, tpu.core_type = #tpu.core_type<tc>} {
    %c0 = arith.constant 0 : index
    %c0_0 = arith.constant 0 : index
    %0 = vector.load %arg0[%c0, %c0_0] : memref<2x12xf32, #tpu.memory_space<vmem>>, vector<2x12xf32>
    %c0_1 = arith.constant 0 : index
    %c0_2 = arith.constant 0 : index
    %1 = vector.load %arg5[%c0_1, %c0_2] : memref<18x16xf32, #tpu.memory_space<vmem>>, vector<2x12xf32>
    tpu.vector_store %arg5[%c0_1, %c0_2], %0 {strides = array<i32>} : memref<18x16xf32, #tpu.memory_space<vmem>>, vector<2x12xf32>,
    %c0_3 = arith.constant 0 : index
    %c0_4 = arith.constant 0 : index
    %2 = vector.load %arg0[%c0_3, %c0_4] : memref<2x12xf32, #tpu.memory_space<vmem>>, vector<2x12xf32>
    %c2 = arith.constant 2 : index
    %c0_5 = arith.constant 0 : index
    %3 = vector.load %arg5[%c2, %c0_5] : memref<18x16xf32, #tpu.memory_space<vmem>>, vector<2x12xf32>
    tpu.vector_store %arg5[%c2, %c0_5], %2 {strides = array<i32>} : memref<18x16xf32, #tpu.memory_space<vmem>>, vector<2x12xf32>,
    %c0_6 = arith.constant 0 : index
    %c0_7 = arith.constant 0 : index
    %4 = vector.load %arg0[%c0_6, %c0_7] : memref<2x12xf32, #tpu.memory_space<vmem>>, vector<2x12xf32>
    %c4 = arith.constant 4 : index
    %c0_8 = arith.constant 0 : index
    %5 = vector.load %arg5[%c4, %c0_8] : memref<18x16xf32, #tpu.memory_space<vmem>>, vector<2x12xf32>
    tpu.vector_store %arg5[%c4, %c0_8], %4 {strides = array<i32>} : memref<18x16xf32, #tpu.memory_space<vmem>>, vector<2x12xf32>,
    %c0_9 = arith.constant 0 : index
    %c0_10 = arith.constant 0 : index
    %6 = vector.load %arg0[%c0_9, %c0_10] : memref<2x12xf32, #tpu.memory_space<vmem>>, vector<2x12xf32>
    %c6 = arith.constant 6 : index
    %c0_11 = arith.constant 0 : index
    %7 = vector.load %arg5[%c6, %c0_11] : memref<18x16xf32, #tpu.memory_space<vmem>>, vector<2x12xf32>
    tpu.vector_store %arg5[%c6, %c0_11], %6 {strides = array<i32>} : memref<18x16xf32, #tpu.memory_space<vmem>>, vector<2x12xf32>,
    %c0_12 = arith.constant 0 : index
    %c0_13 = arith.constant 0 : index
    %8 = vector.load %arg0[%c0_12, %c0_13] : memref<2x12xf32, #tpu.memory_space<vmem>>, vector<2x12xf32>
    %c8 = arith.constant 8 : index
    %c0_14 = arith.constant 0 : index
    %9 = vector.load %arg5[%c8, %c0_14] : memref<18x16xf32, #tpu.memory_space<vmem>>, vector<2x12xf32>
    tpu.vector_store %arg5[%c8, %c0_14], %8 {strides = array<i32>} : memref<18x16xf32, #tpu.memory_space<vmem>>, vector<2x12xf32>,
    %c0_15 = arith.constant 0 : index
    %c0_16 = arith.constant 0 : index
    %10 = vector.load %arg0[%c0_15, %c0_16] : memref<2x12xf32, #tpu.memory_space<vmem>>, vector<2x12xf32>
    %c10 = arith.constant 10 : index
    %c0_17 = arith.constant 0 : index
    %11 = vector.load %arg5[%c10, %c0_17] : memref<18x16xf32, #tpu.memory_space<vmem>>, vector<2x12xf32>
    tpu.vector_store %arg5[%c10, %c0_17], %10 {strides = array<i32>} : memref<18x16xf32, #tpu.memory_space<vmem>>, vector<2x12xf32>,
    %c0_18 = arith.constant 0 : index
    %c0_19 = arith.constant 0 : index
    %12 = vector.load %arg0[%c0_18, %c0_19] : memref<2x12xf32, #tpu.memory_space<vmem>>, vector<2x12xf32>
    %c12 = arith.constant 12 : index
    %c0_20 = arith.constant 0 : index
    %13 = vector.load %arg5[%c12, %c0_20] : memref<18x16xf32, #tpu.memory_space<vmem>>, vector<2x12xf32>
    tpu.vector_store %arg5[%c12, %c0_20], %12 {strides = array<i32>} : memref<18x16xf32, #tpu.memory_space<vmem>>, vector<2x12xf32>,
    %c0_21 = arith.constant 0 : index
    %c0_22 = arith.constant 0 : index
    %14 = vector.load %arg0[%c0_21, %c0_22] : memref<2x12xf32, #tpu.memory_space<vmem>>, vector<2x12xf32>
    %c14 = arith.constant 14 : index
    %c0_23 = arith.constant 0 : index
    %15 = vector.load %arg5[%c14, %c0_23] : memref<18x16xf32, #tpu.memory_space<vmem>>, vector<2x12xf32>
    tpu.vector_store %arg5[%c14, %c0_23], %14 {strides = array<i32>} : memref<18x16xf32, #tpu.memory_space<vmem>>, vector<2x12xf32>,
    %c0_24 = arith.constant 0 : index
    %c0_25 = arith.constant 0 : index
    %16 = vector.load %arg0[%c0_24, %c0_25] : memref<2x12xf32, #tpu.memory_space<vmem>>, vector<2x12xf32>
    %c16 = arith.constant 16 : index
    %c0_26 = arith.constant 0 : index
    %17 = vector.load %arg5[%c16, %c0_26] : memref<18x16xf32, #tpu.memory_space<vmem>>, vector<2x12xf32>
    tpu.vector_store %arg5[%c16, %c0_26], %16 {strides = array<i32>} : memref<18x16xf32, #tpu.memory_space<vmem>>, vector<2x12xf32>,
    %c0_27 = arith.constant 0 : index
    %c0_28 = arith.constant 0 : index
    %18 = vector.load %arg1[%c0_27, %c0_28] : memref<2x4xf32, #tpu.memory_space<vmem>>, vector<2x4xf32>
    %c0_29 = arith.constant 0 : index
    %c12_30 = arith.constant 12 : index
    %19 = vector.load %arg5[%c0_29, %c12_30] : memref<18x16xf32, #tpu.memory_space<vmem>>, vector<2x4xf32>
    tpu.vector_store %arg5[%c0_29, %c12_30], %18 {strides = array<i32>} : memref<18x16xf32, #tpu.memory_space<vmem>>, vector<2x4xf32>,
    %c0_31 = arith.constant 0 : index
    %c0_32 = arith.constant 0 : index
    %20 = vector.load %arg2[%c0_31, %c0_32] : memref<16x4xf32, #tpu.memory_space<vmem>>, vector<16x4xf32>
    %c2_33 = arith.constant 2 : index
    %c12_34 = arith.constant 12 : index
    %21 = vector.load %arg5[%c2_33, %c12_34] : memref<18x16xf32, #tpu.memory_space<vmem>>, vector<16x4xf32>
    tpu.vector_store %arg5[%c2_33, %c12_34], %20 {strides = array<i32>} : memref<18x16xf32, #tpu.memory_space<vmem>>, vector<16x4xf32>,
    %c0_35 = arith.constant 0 : index
    %c0_36 = arith.constant 0 : index
    %22 = vector.load %arg3[%c0_35, %c0_36] : memref<85x32xf32, #tpu.memory_space<vmem>>, vector<16x32xf32>
    %c16_37 = arith.constant 16 : index
    %c0_38 = arith.constant 0 : index
    %23 = vector.load %arg3[%c16_37, %c0_38] : memref<85x32xf32, #tpu.memory_space<vmem>>, vector<32x32xf32>
    %c48 = arith.constant 48 : index
    %c0_39 = arith.constant 0 : index
    %24 = vector.load %arg3[%c48, %c0_39] : memref<85x32xf32, #tpu.memory_space<vmem>>, vector<32x32xf32>
    %c80 = arith.constant 80 : index
    %c0_40 = arith.constant 0 : index
    %25 = vector.load %arg3[%c80, %c0_40] : memref<85x32xf32, #tpu.memory_space<vmem>>, vector<1x32xf32>
    %c81 = arith.constant 81 : index
    %c0_41 = arith.constant 0 : index
    %26 = vector.load %arg3[%c81, %c0_41] : memref<85x32xf32, #tpu.memory_space<vmem>>, vector<1x32xf32>
    %c82 = arith.constant 82 : index
    %c0_42 = arith.constant 0 : index
    %27 = vector.load %arg3[%c82, %c0_42] : memref<85x32xf32, #tpu.memory_space<vmem>>, vector<1x32xf32>
    %c83 = arith.constant 83 : index
    %c0_43 = arith.constant 0 : index
    %28 = vector.load %arg3[%c83, %c0_43] : memref<85x32xf32, #tpu.memory_space<vmem>>, vector<1x32xf32>
    %c84 = arith.constant 84 : index
    %c0_44 = arith.constant 0 : index
    %29 = vector.load %arg3[%c84, %c0_44] : memref<85x32xf32, #tpu.memory_space<vmem>>, vector<1x1xf32>
    %c0_45 = arith.constant 0 : index
    %c0_46 = arith.constant 0 : index
    %30 = vector.load %arg5[%c0_45, %c0_46] : memref<18x16xf32, #tpu.memory_space<vmem>>, vector<18x16xf32>
    %cst = arith.constant dense<0.000000e+00> : vector<18x32xf32>
    %31 = tpu.matmul %30, %22, %cst {dimension_numbers = #tpu.dot_dimension_numbers<[1], [0], [0], [1], [0, 0, 1, 1], [], []>} : vector<18x16xf32>, vector<16x32xf32>, vector<18x32xf32> -> vector<18x32xf32>
    %32 = vector.broadcast %25 : vector<1x32xf32> to vector<18x32xf32>
    %33 = arith.addf %31, %32 : vector<18x32xf32>
    %cst_47 = arith.constant 0.000000e+00 : f32
    %34 = vector.broadcast %cst_47 : f32 to vector<18x32xf32>
    %35 = arith.maximumf %33, %34 : vector<18x32xf32>
    %cst_48 = arith.constant dense<0.000000e+00> : vector<18x32xf32>
    %36 = tpu.matmul %35, %23, %cst_48 {dimension_numbers = #tpu.dot_dimension_numbers<[1], [0], [0], [1], [0, 0, 1, 1], [], []>} : vector<18x32xf32>, vector<32x32xf32>, vector<18x32xf32> -> vector<18x32xf32>
    %37 = vector.broadcast %26 : vector<1x32xf32> to vector<18x32xf32>
    %38 = arith.addf %36, %37 : vector<18x32xf32>
    %cst_49 = arith.constant 0.000000e+00 : f32
    %39 = vector.broadcast %cst_49 : f32 to vector<18x32xf32>
    %40 = arith.maximumf %38, %39 : vector<18x32xf32>
    %cst_50 = arith.constant dense<0.000000e+00> : vector<18x32xf32>
    %41 = tpu.matmul %40, %24, %cst_50 {dimension_numbers = #tpu.dot_dimension_numbers<[1], [0], [0], [1], [0, 0, 1, 1], [], []>} : vector<18x32xf32>, vector<32x32xf32>, vector<18x32xf32> -> vector<18x32xf32>
    %42 = vector.broadcast %27 : vector<1x32xf32> to vector<18x32xf32>
    %43 = arith.addf %41, %42 : vector<18x32xf32>
    %cst_51 = arith.constant 0.000000e+00 : f32
    %44 = vector.broadcast %cst_51 : f32 to vector<18x32xf32>
    %45 = arith.maximumf %43, %44 : vector<18x32xf32>
    %46 = vector.broadcast %28 : vector<1x32xf32> to vector<18x32xf32>
    %47 = arith.mulf %45, %46 : vector<18x32xf32>
    %cst_52 = arith.constant dense<0.000000e+00> : vector<18xf32>
    %48 = vector.multi_reduction <add>, %47, %cst_52 [1] : vector<18x32xf32> to vector<18xf32>
    %49 = vector.shape_cast %48 : vector<18xf32> to vector<18x1xf32>
    %50 = vector.broadcast %29 : vector<1x1xf32> to vector<18x1xf32>
    %51 = arith.addf %49, %50 : vector<18x1xf32>
    %cst_53 = arith.constant 0.000000e+00 : f32
    %52 = vector.broadcast %cst_53 : f32 to vector<18x1xf32>
    %53 = arith.subf %52, %51 : vector<18x1xf32>
    %54 = math.exp %53 : vector<18x1xf32>
    %55 = vector.extract_strided_slice %54 {offsets = [0, 0], sizes = [2, 1], strides = [1, 1]} : vector<18x1xf32> to vector<2x1xf32>
    %56 = vector.extract_strided_slice %54 {offsets = [2, 0], sizes = [16, 1], strides = [1, 1]} : vector<18x1xf32> to vector<16x1xf32>
    %57 = vector.extract_strided_slice %56 {offsets = [0, 0], sizes = [8, 1], strides = [1, 1]} : vector<16x1xf32> to vector<8x1xf32>
    %58 = vector.extract_strided_slice %56 {offsets = [8, 0], sizes = [8, 1], strides = [1, 1]} : vector<16x1xf32> to vector<8x1xf32>
    %59 = arith.addf %57, %58 : vector<8x1xf32>
    %60 = vector.extract_strided_slice %59 {offsets = [0, 0], sizes = [4, 1], strides = [1, 1]} : vector<8x1xf32> to vector<4x1xf32>
    %61 = vector.extract_strided_slice %59 {offsets = [4, 0], sizes = [4, 1], strides = [1, 1]} : vector<8x1xf32> to vector<4x1xf32>
    %62 = arith.addf %60, %61 : vector<4x1xf32>
    %63 = vector.extract_strided_slice %62 {offsets = [0, 0], sizes = [2, 1], strides = [1, 1]} : vector<4x1xf32> to vector<2x1xf32>
    %64 = vector.extract_strided_slice %62 {offsets = [2, 0], sizes = [2, 1], strides = [1, 1]} : vector<4x1xf32> to vector<2x1xf32>
    %65 = arith.addf %63, %64 : vector<2x1xf32>
    %66 = arith.addf %55, %65 : vector<2x1xf32>
    %67 = tpu.reciprocal %66 {approx = true} : vector<2x1xf32> -> vector<2x1xf32>
    %68 = arith.mulf %66, %67 : vector<2x1xf32>
    %cst_54 = arith.constant 2.000000e+00 : f32
    %69 = vector.broadcast %cst_54 : f32 to vector<2x1xf32>
    %70 = arith.subf %69, %68 : vector<2x1xf32>
    %71 = arith.mulf %67, %70 : vector<2x1xf32>
    %72 = arith.mulf %55, %71 : vector<2x1xf32>
    %c0_55 = arith.constant 0 : index
    %c0_56 = arith.constant 0 : index
    %73 = vector.load %arg4[%c0_55, %c0_56] : memref<2x1xf32, #tpu.memory_space<vmem>>, vector<2x1xf32>
    tpu.vector_store %arg4[%c0_55, %c0_56], %72 {strides = array<i32>} : memref<2x1xf32, #tpu.memory_space<vmem>>, vector<2x1xf32>,
    return
  }
}

</mosaic_0001>

<llo_original>
// kernel: tpu_custom_call.1
$region0: #{tpu_custom_call.1}
  #allocation0 [shape = 'u32[]', space=smem, size = 0x4, offset = 0x4, fixed_abs, tag = 'smem constant byte address 0x4 - core index']
  #allocation1 [shape = 'u32[144,128]{1,0:T(1,128)}', space=vmem, size = 0x12000, scoped, tag = 'internal scratch']
  #allocation2 [shape = 'f32[18,16]{1,0:T(8,128)}', space=vmem, size = 0x3000, scoped, tag = 'scratch operand']
  %s0 = inlined_call_operand.vmem [shape: f32[2,12], index: 0, kind: input, shape index: {}]
  %s1 = inlined_call_operand.vmem [shape: f32[2,4], index: 1, kind: input, shape index: {}]
  %s2 = inlined_call_operand.vmem [shape: f32[16,4], index: 2, kind: input, shape index: {}]
  %s3 = inlined_call_operand.vmem [shape: f32[85,32], index: 3, kind: input, shape index: {}]
  %s4 = inlined_call_operand.vmem [shape: f32[2,1], index: 4, kind: output, shape index: {}]
  %s5 = sld [smem:[#allocation0]]
  $region26: #{tpu_custom_call.1} parent=0
    _
  %s7 = ssub.s32 1, %s5
  %s8 = scalar_select 0, %s7, %s5
  // Predicated region
  $region2: #{tpu_custom_call.1} parent=0 // pred_check
    _
  $region3: #{tpu_custom_call.1} parent=0 // pred_check_branch
    %10 = sbr.rel (0) target = $region5
  $region4: #{tpu_custom_call.1} parent=0 // pred_region
    _
  $region5: #{tpu_custom_call.1} parent=0 // pred_fallthru
    _
  // Predicated region
  $region6: #{tpu_custom_call.1} parent=0 // pred_check
    _
  $region7: #{tpu_custom_call.1} parent=0 // pred_check_branch
    %12 = sbr.rel (0) target = $region9
  $region8: #{tpu_custom_call.1} parent=0 // pred_region
    _
  $region9: #{tpu_custom_call.1} parent=0 // pred_fallthru
    _
  // Predicated region
  $region10: #{tpu_custom_call.1} parent=0 // pred_check
    _
  $region11: #{tpu_custom_call.1} parent=0 // pred_check_branch
    %14 = sbr.rel (0) target = $region13
  $region12: #{tpu_custom_call.1} parent=0 // pred_region
    _
  $region13: #{tpu_custom_call.1} parent=0 // pred_fallthru
    _
  // Predicated region
  $region14: #{tpu_custom_call.1} parent=0 // pred_check
    _
  $region15: #{tpu_custom_call.1} parent=0 // pred_check_branch
    %16 = sbr.rel (0) target = $region17
  $region16: #{tpu_custom_call.1} parent=0 // pred_region
    _
  $region17: #{tpu_custom_call.1} parent=0 // pred_fallthru
    _
  %v17 = vld [vmem:[%s0] sm:$0x3]
  %vm18 = vcmask 91136
  %19 = vst.msk [vmem:[#allocation2] sm:$0x3] %vm18, %v17
  %v20 = vld [vmem:[%s0] sm:$0x3]
  %21 = vst.msk [vmem:[#allocation2 + $0x2] sm:$0x3] %vm18, %v20
  %v22 = vld [vmem:[%s0] sm:$0x3]
  %23 = vst.msk [vmem:[#allocation2 + $0x4] sm:$0x3] %vm18, %v22
  %v24 = vld [vmem:[%s0] sm:$0x3]
  %25 = vst.msk [vmem:[#allocation2 + $0x6] sm:$0x3] %vm18, %v24
  %v26 = vld [vmem:[%s0] sm:$0x3]
  %27 = vst.msk [vmem:[#allocation2 + $0x8] sm:$0x3] %vm18, %v26
  %v28 = vld [vmem:[%s0] sm:$0x3]
  %29 = vst.msk [vmem:[#allocation2 + $0xa] sm:$0x3] %vm18, %v28
  %v30 = vld [vmem:[%s0] sm:$0x3]
  %31 = vst.msk [vmem:[#allocation2 + $0xc] sm:$0x3] %vm18, %v30
  %v32 = vld [vmem:[%s0] sm:$0x3]
  %33 = vst.msk [vmem:[#allocation2 + $0xe] sm:$0x3] %vm18, %v32
  %v34 = vld [vmem:[%s0] sm:$0x3]
  %35 = vst.msk [vmem:[#allocation2 + $0x10] sm:$0x3] %vm18, %v34
  %v36 = vld [vmem:[%s1] sm:$0x3]
  %38 = vrot.lane.b32.xlu0 %v36, 12
  %v39 = vpop.permute.xlu0 %38
  %vm41 = vcmask 124000
  %42 = vst.msk [vmem:[#allocation2] sm:$0x3] %vm41, %v39
  %v43 = vld [vmem:[%s2] sm:$0xff]
  %v44 = vld [vmem:[%s2 + $0x8] sm:$0xff]
  %47 = vrot.lane.b32.xlu0 %v43, 12
  %v48 = vpop.permute.xlu0 %47
  %49 = vrot.lane.b32.xlu0 %v44, 12
  %v50 = vpop.permute.xlu0 %49
  %vm53 = vcmask 130144
  %54 = vst.msk [vmem:[#allocation2 + $0x2] sm:$0xff] %vm53, %v48
  %55 = vst.msk [vmem:[#allocation2 + $0xa] sm:$0xff] %vm53, %v50
  %v56 = vld [vmem:[%s3] sm:$0xff]
  %v57 = vld [vmem:[%s3 + $0x8] sm:$0xff]
  %v58 = vld [vmem:[%s3 + $0x10] sm:$0xff]
  %v59 = vld [vmem:[%s3 + $0x18] sm:$0xff]
  %v60 = vld [vmem:[%s3 + $0x20] sm:$0xff]
  %v61 = vld [vmem:[%s3 + $0x28] sm:$0xff]
  %v62 = vld [vmem:[%s3 + $0x30] sm:$0xff]
  %v63 = vld [vmem:[%s3 + $0x38] sm:$0xff]
  %v64 = vld [vmem:[%s3 + $0x40] sm:$0xff]
  %v65 = vld [vmem:[%s3 + $0x48] sm:$0xff]
  %v66 = vld [vmem:[%s3 + $0x50] sm:$0x1]
  %v67 = vld [vmem:[%s3 + $0x51] sm:$0x1]
  %v68 = vld [vmem:[%s3 + $0x52] sm:$0x1]
  %v69 = vld [vmem:[%s3 + $0x53] sm:$0x1]
  %v70 = vld [vmem:[%s3 + $0x54] sm:$0x1]
  %v71 = vld [vmem:[#allocation2] sm:$0xff]
  %v72 = vld [vmem:[#allocation2 + $0x8] sm:$0xff]
  %v73 = vld [vmem:[#allocation2 + $0x10] sm:$0x3]
  %v74 = vlaneseq
  %v75 = vshrl.u32 %v74, 7
  %v76 = vsub.s32 0, %v75
  %v77 = vrot.slane %v66, %v76
  %vm78 = vcmask 130048
  %v80 = vsel %vm78, %v71, 0
  %v83 = vsel %vm78, %v72, 0
  %v86 = vsel %vm78, %v73, 0
  %88 = vmatprep.subr.mxu0 0.0
  %89 = vmatpush1.msra.mxu0 %v56
  %90 = vmatprep.subr.mxu0 0.0
  %91 = vmatpush1.msra.mxu0 %v57
  %92 = vmatprep.subr.mxu0 0.0
  %93 = vmatpush1.msra.mxu0 0.0
  %94 = vmatprep.subr.mxu0 0.0
  %95 = vmatpush1.msra.mxu0 0.0
  %96 = vmatprep.subr.mxu0 0.0
  %97 = vmatpush1.msra.mxu0 0.0
  %98 = vmatprep.subr.mxu0 0.0
  %99 = vmatpush1.msra.mxu0 0.0
  %100 = vmatprep.subr.mxu0 0.0
  %101 = vmatpush1.msra.mxu0 0.0
  %102 = vmatprep.subr.mxu0 0.0
  %103 = vmatpush1.msra.mxu0 0.0
  %104 = vmatprep.subr.mxu0 0.0
  %105 = vmatpush1.msra.mxu0 0.0
  %106 = vmatprep.subr.mxu0 0.0
  %107 = vmatpush1.msra.mxu0 0.0
  %108 = vmatprep.subr.mxu0 0.0
  %109 = vmatpush1.msra.mxu0 0.0
  %110 = vmatprep.subr.mxu0 0.0
  %111 = vmatpush1.msra.mxu0 0.0
  %112 = vmatprep.subr.mxu0 0.0
  %113 = vmatpush1.msra.mxu0 0.0
  %114 = vmatprep.subr.mxu0 0.0
  %115 = vmatpush1.msra.mxu0 0.0
  %116 = vmatprep.subr.mxu0 0.0
  %117 = vmatpush1.msra.mxu0 0.0
  %118 = vmatprep.subr.mxu0 0.0
  %119 = vmatpush1.msra.mxu0 0.0
  %120 = vmatprep.subr.mxu0 0.0
  %121 = vmatpush1.msra.mxu0 0.0
  %122 = vmatprep.subr.mxu0 0.0
  %123 = vmatpush1.msra.mxu0 0.0
  %124 = vmatprep.subr.mxu0 0.0
  %125 = vmatpush1.msra.mxu0 0.0
  %126 = vmatprep.subr.mxu0 0.0
  %127 = vmatpush1.msra.mxu0 0.0
  %128 = vmatprep.subr.mxu0 0.0
  %129 = vmatpush1.msra.mxu0 0.0
  %130 = vmatprep.subr.mxu0 0.0
  %131 = vmatpush1.msra.mxu0 0.0
  %132 = vmatprep.subr.mxu0 0.0
  %133 = vmatpush1.msra.mxu0 0.0
  %134 = vmatprep.subr.mxu0 0.0
  %135 = vmatpush1.msra.mxu0 0.0
  %136 = vmatprep.subr.mxu0 0.0
  %137 = vmatpush1.msra.mxu0 0.0
  %138 = vmatprep.subr.mxu0 0.0
  %139 = vmatpush1.msra.mxu0 0.0
  %140 = vmatprep.subr.mxu0 0.0
  %141 = vmatpush1.msra.mxu0 0.0
  %142 = vmatprep.subr.mxu0 0.0
  %143 = vmatpush1.msra.mxu0 0.0
  %144 = vmatprep.subr.mxu0 0.0
  %145 = vmatpush1.msra.mxu0 0.0
  %146 = vmatprep.subr.mxu0 0.0
  %147 = vmatpush1.msra.mxu0 0.0
  %148 = vmatprep.subr.mxu0 0.0
  %149 = vmatpush1.msra.mxu0 0.0
  %150 = vmatprep.subr.mxu0 0.0
  %151 = vmatpush1.msra.mxu0 0.0
  %152 = vmatprep.mubr.f32.mxu0 0.0
  %153 = vmatmul.mubr.f32.gmra.mrb[0].mxu0 %v80
  %v154 = vpop.f32.mrb[0].mxu0
  %v155 = vadd.f32 %v77, %v154
  %v156 = vpop.f32.mrb[0].mxu0
  %157 = vmatprep.mubr.f32.mxu0 0.0
  %158 = vmatmul.mubr.f32.gmra.mrb[0].mxu0 %v83
  %v159 = vpop.f32.mrb[0].mxu0
  %v160 = vadd.f32 %v77, %v159
  %v161 = vpop.f32.mrb[0].mxu0
  %162 = vmatprep.mubr.f32.mxu0 0.0
  %163 = vmatmul.mubr.f32.gmra.mrb[0].mxu0 %v86
  %v164 = vpop.f32.mrb[0].mxu0
  %v165 = vadd.f32 %v77, %v164
  %v166 = vpop.f32.mrb[0].mxu0
  %167 = vdwg.mxu0
  %v168 = vmax.f32 %v155, 0.0
  %v169 = vmax.f32 %v160, 0.0
  %v170 = vmax.f32 %v165, 0.0
  %v171 = vlaneseq
  %v172 = vshrl.u32 %v171, 7
  %v173 = vsub.s32 0, %v172
  %v174 = vrot.slane %v67, %v173
  %vm175 = vcmask 261120
  %v177 = vsel %vm175, %v168, 0
  %v180 = vsel %vm175, %v169, 0
  %v183 = vsel %vm175, %v170, 0
  %185 = vmatprep.subr.mxu0 0.0
  %186 = vmatpush1.msra.mxu0 %v58
  %187 = vmatprep.subr.mxu0 0.0
  %188 = vmatpush1.msra.mxu0 %v59
  %189 = vmatprep.subr.mxu0 0.0
  %190 = vmatpush1.msra.mxu0 %v60
  %191 = vmatprep.subr.mxu0 0.0
  %192 = vmatpush1.msra.mxu0 %v61
  %193 = vmatprep.subr.mxu0 0.0
  %194 = vmatpush1.msra.mxu0 0.0
  %195 = vmatprep.subr.mxu0 0.0
  %196 = vmatpush1.msra.mxu0 0.0
  %197 = vmatprep.subr.mxu0 0.0
  %198 = vmatpush1.msra.mxu0 0.0
  %199 = vmatprep.subr.mxu0 0.0
  %200 = vmatpush1.msra.mxu0 0.0
  %201 = vmatprep.subr.mxu0 0.0
  %202 = vmatpush1.msra.mxu0 0.0
  %203 = vmatprep.subr.mxu0 0.0
  %204 = vmatpush1.msra.mxu0 0.0
  %205 = vmatprep.subr.mxu0 0.0
  %206 = vmatpush1.msra.mxu0 0.0
  %207 = vmatprep.subr.mxu0 0.0
  %208 = vmatpush1.msra.mxu0 0.0
  %209 = vmatprep.subr.mxu0 0.0
  %210 = vmatpush1.msra.mxu0 0.0
  %211 = vmatprep.subr.mxu0 0.0
  %212 = vmatpush1.msra.mxu0 0.0
  %213 = vmatprep.subr.mxu0 0.0
  %214 = vmatpush1.msra.mxu0 0.0
  %215 = vmatprep.subr.mxu0 0.0
  %216 = vmatpush1.msra.mxu0 0.0
  %217 = vmatprep.subr.mxu0 0.0
  %218 = vmatpush1.msra.mxu0 0.0
  %219 = vmatprep.subr.mxu0 0.0
  %220 = vmatpush1.msra.mxu0 0.0
  %221 = vmatprep.subr.mxu0 0.0
  %222 = vmatpush1.msra.mxu0 0.0
  %223 = vmatprep.subr.mxu0 0.0
  %224 = vmatpush1.msra.mxu0 0.0
  %225 = vmatprep.subr.mxu0 0.0
  %226 = vmatpush1.msra.mxu0 0.0
  %227 = vmatprep.subr.mxu0 0.0
  %228 = vmatpush1.msra.mxu0 0.0
  %229 = vmatprep.subr.mxu0 0.0
  %230 = vmatpush1.msra.mxu0 0.0
  %231 = vmatprep.subr.mxu0 0.0
  %232 = vmatpush1.msra.mxu0 0.0
  %233 = vmatprep.subr.mxu0 0.0
  %234 = vmatpush1.msra.mxu0 0.0
  %235 = vmatprep.subr.mxu0 0.0
  %236 = vmatpush1.msra.mxu0 0.0
  %237 = vmatprep.subr.mxu0 0.0
  %238 = vmatpush1.msra.mxu0 0.0
  %239 = vmatprep.subr.mxu0 0.0
  %240 = vmatpush1.msra.mxu0 0.0
  %241 = vmatprep.subr.mxu0 0.0
  %242 = vmatpush1.msra.mxu0 0.0
  %243 = vmatprep.subr.mxu0 0.0
  %244 = vmatpush1.msra.mxu0 0.0
  %245 = vmatprep.subr.mxu0 0.0
  %246 = vmatpush1.msra.mxu0 0.0
  %247 = vmatprep.subr.mxu0 0.0
  %248 = vmatpush1.msra.mxu0 0.0
  %249 = vmatprep.mubr.f32.mxu0 0.0
  %250 = vmatmul.mubr.f32.gmra.mrb[0].mxu0 %v177
  %v251 = vpop.f32.mrb[0].mxu0
  %v252 = vadd.f32 %v174, %v251
  %v253 = vpop.f32.mrb[0].mxu0
  %254 = vmatprep.mubr.f32.mxu0 0.0
  %255 = vmatmul.mubr.f32.gmra.mrb[0].mxu0 %v180
  %v256 = vpop.f32.mrb[0].mxu0
  %v257 = vadd.f32 %v174, %v256
  %v258 = vpop.f32.mrb[0].mxu0
  %259 = vmatprep.mubr.f32.mxu0 0.0
  %260 = vmatmul.mubr.f32.gmra.mrb[0].mxu0 %v183
  %v261 = vpop.f32.mrb[0].mxu0
  %v262 = vadd.f32 %v174, %v261
  %v263 = vpop.f32.mrb[0].mxu0
  %264 = vdwg.mxu0
  %v265 = vmax.f32 %v252, 0.0
  %v266 = vmax.f32 %v257, 0.0
  %v267 = vmax.f32 %v262, 0.0
  %v268 = vlaneseq
  %v269 = vshrl.u32 %v268, 7
  %v270 = vsub.s32 0, %v269
  %v271 = vrot.slane %v68, %v270
  %v273 = vsel %vm175, %v265, 0
  %v276 = vsel %vm175, %v266, 0
  %v279 = vsel %vm175, %v267, 0
  %281 = vmatprep.subr.mxu0 0.0
  %282 = vmatpush1.msra.mxu0 %v62
  %283 = vmatprep.subr.mxu0 0.0
  %284 = vmatpush1.msra.mxu0 %v63
  %285 = vmatprep.subr.mxu0 0.0
  %286 = vmatpush1.msra.mxu0 %v64
  %287 = vmatprep.subr.mxu0 0.0
  %288 = vmatpush1.msra.mxu0 %v65
  %289 = vmatprep.subr.mxu0 0.0
  %290 = vmatpush1.msra.mxu0 0.0
  %291 = vmatprep.subr.mxu0 0.0
  %292 = vmatpush1.msra.mxu0 0.0
  %293 = vmatprep.subr.mxu0 0.0
  %294 = vmatpush1.msra.mxu0 0.0
  %295 = vmatprep.subr.mxu0 0.0
  %296 = vmatpush1.msra.mxu0 0.0
  %297 = vmatprep.subr.mxu0 0.0
  %298 = vmatpush1.msra.mxu0 0.0
  %299 = vmatprep.subr.mxu0 0.0
  %300 = vmatpush1.msra.mxu0 0.0
  %301 = vmatprep.subr.mxu0 0.0
  %302 = vmatpush1.msra.mxu0 0.0
  %303 = vmatprep.subr.mxu0 0.0
  %304 = vmatpush1.msra.mxu0 0.0
  %305 = vmatprep.subr.mxu0 0.0
  %306 = vmatpush1.msra.mxu0 0.0
  %307 = vmatprep.subr.mxu0 0.0
  %308 = vmatpush1.msra.mxu0 0.0
  %309 = vmatprep.subr.mxu0 0.0
  %310 = vmatpush1.msra.mxu0 0.0
  %311 = vmatprep.subr.mxu0 0.0
  %312 = vmatpush1.msra.mxu0 0.0
  %313 = vmatprep.subr.mxu0 0.0
  %314 = vmatpush1.msra.mxu0 0.0
  %315 = vmatprep.subr.mxu0 0.0
  %316 = vmatpush1.msra.mxu0 0.0
  %317 = vmatprep.subr.mxu0 0.0
  %318 = vmatpush1.msra.mxu0 0.0
  %319 = vmatprep.subr.mxu0 0.0
  %320 = vmatpush1.msra.mxu0 0.0
  %321 = vmatprep.subr.mxu0 0.0
  %322 = vmatpush1.msra.mxu0 0.0
  %323 = vmatprep.subr.mxu0 0.0
  %324 = vmatpush1.msra.mxu0 0.0
  %325 = vmatprep.subr.mxu0 0.0
  %326 = vmatpush1.msra.mxu0 0.0
  %327 = vmatprep.subr.mxu0 0.0
  %328 = vmatpush1.msra.mxu0 0.0
  %329 = vmatprep.subr.mxu0 0.0
  %330 = vmatpush1.msra.mxu0 0.0
  %331 = vmatprep.subr.mxu0 0.0
  %332 = vmatpush1.msra.mxu0 0.0
  %333 = vmatprep.subr.mxu0 0.0
  %334 = vmatpush1.msra.mxu0 0.0
  %335 = vmatprep.subr.mxu0 0.0
  %336 = vmatpush1.msra.mxu0 0.0
  %337 = vmatprep.subr.mxu0 0.0
  %338 = vmatpush1.msra.mxu0 0.0
  %339 = vmatprep.subr.mxu0 0.0
  %340 = vmatpush1.msra.mxu0 0.0
  %341 = vmatprep.subr.mxu0 0.0
  %342 = vmatpush1.msra.mxu0 0.0
  %343 = vmatprep.subr.mxu0 0.0
  %344 = vmatpush1.msra.mxu0 0.0
  %345 = vmatprep.mubr.f32.mxu0 0.0
  %346 = vmatmul.mubr.f32.gmra.mrb[0].mxu0 %v273
  %v347 = vpop.f32.mrb[0].mxu0
  %v348 = vadd.f32 %v271, %v347
  %v349 = vpop.f32.mrb[0].mxu0
  %350 = vmatprep.mubr.f32.mxu0 0.0
  %351 = vmatmul.mubr.f32.gmra.mrb[0].mxu0 %v276
  %v352 = vpop.f32.mrb[0].mxu0
  %v353 = vadd.f32 %v271, %v352
  %v354 = vpop.f32.mrb[0].mxu0
  %355 = vmatprep.mubr.f32.mxu0 0.0
  %356 = vmatmul.mubr.f32.gmra.mrb[0].mxu0 %v279
  %v357 = vpop.f32.mrb[0].mxu0
  %v358 = vadd.f32 %v271, %v357
  %v359 = vpop.f32.mrb[0].mxu0
  %360 = vdwg.mxu0
  %v361 = vmax.f32 %v348, 0.0
  %v362 = vmax.f32 %v353, 0.0
  %v363 = vmax.f32 %v358, 0.0
  %v364 = vlaneseq
  %v365 = vshrl.u32 %v364, 7
  %v366 = vsub.s32 0, %v365
  %v367 = vrot.slane %v69, %v366
  %v368 = vmul.f32 %v361, %v367
  %v369 = vmul.f32 %v362, %v367
  %v370 = vmul.f32 %v363, %v367
  %v371 = vsel %vm175, %v368, 0.0
  %372 = vadd.xlane.f32.xlu0 %v371
  %v373 = vpop.xlane.xlu0 %372
  %v374 = vsel %vm175, %v369, 0.0
  %375 = vadd.xlane.f32.xlu0 %v374
  %v376 = vpop.xlane.xlu0 %375
  %vm377 = vcmask 254976
  %v378 = vsel %vm377, %v370, 0.0
  %379 = vadd.xlane.f32.xlu0 %v378
  %v380 = vpop.xlane.xlu0 %379
  %v381 = vlaneseq
  %v382 = vshrl.u32 %v381, 7
  %v383 = vsub.s32 0, %v382
  %v384 = vrot.slane %v70, %v383
  %v385 = vadd.f32 %v373, %v384
  %v386 = vadd.f32 %v376, %v384
  %v387 = vadd.f32 %v380, %v384
  %v388 = vsub.f32 0.0, %v385
  %v389 = vsub.f32 0.0, %v386
  %v390 = vsub.f32 0.0, %v387
  %v391 = vmul.f32 %v388, 1.442695
  %v392 = vpow.pop %v391
  %v393 = vmul.f32 %v389, 1.442695
  %v394 = vpow.pop %v393
  %v395 = vmul.f32 %v390, 1.442695
  %v396 = vpow.pop %v395
  %v397 = vadd.f32 %v392, %v394
  %v398 = vadd.f32 %v394, %v396
  %vm401 = vcmask 1043456
  %v402 = vrot.slane %v397, 4
  %v403 = vrot.slane %v398, 4
  %v404 = vsel %vm401, %v402, %v403
  %v406 = vadd.f32 %v397, %v404
  %v408 = vrot.slane %v406, 2
  %v410 = vadd.f32 %v406, %v408
  %v412 = vrot.slane %v410, 2
  %v414 = vadd.f32 %v392, %v412
  %v415 = vrcp.pop %v414
  %v416 = vmul.f32 %v414, %v415
  %v417 = vsub.f32 2.0, %v416
  %v418 = vmul.f32 %v415, %v417
  %v419 = vmul.f32 %v392, %v418
  %vm420 = vcmask 1024
  %421 = vst.msk [vmem:[%s4] sm:$0x3] %vm420, %v419
  // Predicated region
  $region18: #{tpu_custom_call.1} parent=0 // pred_check
    _
  $region19: #{tpu_custom_call.1} parent=0 // pred_check_branch
    %423 = sbr.rel (0) target = $region21
  $region20: #{tpu_custom_call.1} parent=0 // pred_region
    _
  $region21: #{tpu_custom_call.1} parent=0 // pred_fallthru
    _
  // Predicated region
  $region22: #{tpu_custom_call.1} parent=0 // pred_check
    _
  $region23: #{tpu_custom_call.1} parent=0 // pred_check_branch
    %425 = sbr.rel (0) target = $region25
  $region24: #{tpu_custom_call.1} parent=0 // pred_region
    _
  $region25: #{tpu_custom_call.1} parent=0 // pred_fallthru
    _

</llo_original>
